<compile_context>
chip_gen: v7x
topology: tpu7x:2x2x1
jax: 0.10.0
libtpu: 0.0.40
codegen_flags: <defaults>
</compile_context>

<pallas_src>
import jax
import jax.numpy as jnp
from jax.experimental import pallas as pl
from jax.experimental.pallas import tpu as pltpu


HIDDEN_PAD = 128  # pad hidden width (n=50) up to one full 128-lane vreg column


def _round_up(x, m):
    return (x + m - 1) // m * m


def cell_mlp_kernel(x_ref,
                    w1_ref, b1_ref,
                    w2_ref, b2_ref,
                    w3_ref, b3_ref,
                    w4_ref, b4_ref,
                    o_ref):
    # Layer 1: Linear(input_dim, n) + ReLU  (bf16 MXU operands, f32 accumulate)
    x = x_ref[...].astype(jnp.bfloat16)
    h = jnp.dot(x, w1_ref[...], preferred_element_type=jnp.float32) + b1_ref[...]
    h = jnp.maximum(h, 0.0)

    # Layer 2: Linear(n, n) + ReLU
    h = jnp.dot(h.astype(jnp.bfloat16), w2_ref[...],
                preferred_element_type=jnp.float32) + b2_ref[...]
    h = jnp.maximum(h, 0.0)

    # Layer 3: Linear(n, n) + ReLU
    h = jnp.dot(h.astype(jnp.bfloat16), w3_ref[...],
                preferred_element_type=jnp.float32) + b3_ref[...]
    h = jnp.maximum(h, 0.0)

    # Layer 4: Linear(n, 2), no activation. Output kept 2-lane (tiny writeback).
    out = jnp.dot(h.astype(jnp.bfloat16), w4_ref[...],
                  preferred_element_type=jnp.float32) + b4_ref[...]
    o_ref[...] = out.astype(o_ref.dtype)


def prepare_params(params, hidden_pad=HIDDEN_PAD):
    """Pad feature dims to lane-dense shapes (once, outside the kernel) and cast
    weights to bf16 for the MXU.  Zero padding keeps the math identical."""
    in_dim, n = params["w1"].shape
    out_dim = params["w4"].shape[1]
    H = max(hidden_pad, _round_up(n, 128))

    def pad2(a, rows, cols):
        return jnp.pad(a, ((0, rows - a.shape[0]), (0, cols - a.shape[1])))

    return dict(
        w1=pad2(params["w1"], in_dim, H).astype(jnp.bfloat16),
        b1=pad2(params["b1"], 1, H).astype(jnp.float32),
        w2=pad2(params["w2"], H, H).astype(jnp.bfloat16),
        b2=pad2(params["b2"], 1, H).astype(jnp.float32),
        w3=pad2(params["w3"], H, H).astype(jnp.bfloat16),
        b3=pad2(params["b3"], 1, H).astype(jnp.float32),
        w4=pad2(params["w4"], H, out_dim).astype(jnp.bfloat16),
        b4=params["b4"].astype(jnp.float32),
    )


def cell_mlp(x, p, *, tb=256):
    """x: (B, input_dim) float32.  p: output of prepare_params()."""
    B, in_dim = x.shape
    H = p["w1"].shape[1]
    out_dim = p["w4"].shape[1]

    # Batch tile: multiple of 8 (f32 sublanes), capped at 256 rows so each
    # activation tile is <= 32 vregs (no spills between the four matmuls).
    TB = min(tb, _round_up(B, 8))
    Bp = _round_up(B, TB)
    if Bp != B:
        x = jnp.pad(x, ((0, Bp - B), (0, 0)))

    grid = (Bp // TB,)

    def resident(shape):
        # weights / biases: same block every grid step -> stay VMEM-resident.
        return pl.BlockSpec(shape, lambda i: (0, 0))

    flops = 2 * Bp * (in_dim * H + H * H + H * H + H * out_dim)
    weight_bytes = sum(int(v.size) * v.dtype.itemsize for v in p.values())
    bytes_accessed = Bp * in_dim * 4 + Bp * out_dim * 4 + weight_bytes
    cost = pl.CostEstimate(flops=int(flops), transcendentals=0,
                           bytes_accessed=int(bytes_accessed))

    out = pl.pallas_call(
        cell_mlp_kernel,
        out_shape=jax.ShapeDtypeStruct((Bp, out_dim), jnp.float32),
        grid=grid,
        in_specs=[
            pl.BlockSpec((TB, in_dim), lambda i: (i, 0)),    # x: batch-tiled
            resident((in_dim, H)), resident((1, H)),         # layer 1
            resident((H, H)), resident((1, H)),              # layer 2
            resident((H, H)), resident((1, H)),              # layer 3
            resident((H, out_dim)), resident((1, out_dim)),  # layer 4
        ],
        out_specs=pl.BlockSpec((TB, out_dim), lambda i: (i, 0)),
        compiler_params=pltpu.CompilerParams(
            dimension_semantics=("parallel",)),
        cost_estimate=cost,
    )(x,
      p["w1"], p["b1"],
      p["w2"], p["b2"],
      p["w3"], p["b3"],
      p["w4"], p["b4"])

    return out[:B]


def init_params(key, n=50, input_dim=24):
    """Deterministic init matching PyTorch Linear shapes (stored transposed)."""
    ks = jax.random.split(key, 8)

    def linear(kw, kb, fan_in, fan_out):
        bound = 1.0 / jnp.sqrt(fan_in)
        w = jax.random.uniform(kw, (fan_in, fan_out), jnp.float32, -bound, bound)
        b = jax.random.uniform(kb, (1, fan_out), jnp.float32, -bound, bound)
        return w, b

    w1, b1 = linear(ks[0], ks[1], input_dim, n)
    w2, b2 = linear(ks[2], ks[3], n, n)
    w3, b3 = linear(ks[4], ks[5], n, n)
    w4, b4 = linear(ks[6], ks[7], n, 2)
    return dict(w1=w1, b1=b1, w2=w2, b2=b2, w3=w3, b3=b3, w4=w4, b4=b4)


def cell_mlp_ref(x, p):
    """Pure-JAX reference mimicking the kernel's bf16 operands / f32 accumulate."""
    def mm(a, w):
        return jnp.dot(a.astype(jnp.bfloat16), w.astype(jnp.bfloat16),
                       preferred_element_type=jnp.float32)
    h = jnp.maximum(mm(x, p["w1"]) + p["b1"], 0.0)
    h = jnp.maximum(mm(h, p["w2"]) + p["b2"], 0.0)
    h = jnp.maximum(mm(h, p["w3"]) + p["b3"], 0.0)
    return mm(h, p["w4"]) + p["b4"]


if __name__ == "__main__":
    key = jax.random.PRNGKey(0)
    k_param, k_x = jax.random.split(key)

    n, input_dim, batch = 50, 24, 8
    params = init_params(k_param, n=n, input_dim=input_dim)
    padded = prepare_params(params)
    x = jax.random.normal(k_x, (batch, input_dim), jnp.float32)

    out = cell_mlp(x, padded)
    out = jax.block_until_ready(out)

    ref = cell_mlp_ref(x, params)
    assert out.shape == (batch, 2), out.shape
    assert jnp.allclose(out, ref, atol=1e-2, rtol=1e-2), \
        f"max err {jnp.max(jnp.abs(out - ref))}"

    print("KERNEL_OK")
</pallas_src>

<mosaic_0001>
module attributes {stable_mosaic.version = 11 : i64} {
  func.func @cell_mlp_kernel(%arg0: i32, %arg1: memref<8x24xf32, #tpu.memory_space<vmem>>, %arg2: memref<24x128xbf16, #tpu.memory_space<vmem>>, %arg3: memref<1x128xf32, #tpu.memory_space<vmem>>, %arg4: memref<128x128xbf16, #tpu.memory_space<vmem>>, %arg5: memref<1x128xf32, #tpu.memory_space<vmem>>, %arg6: memref<128x128xbf16, #tpu.memory_space<vmem>>, %arg7: memref<1x128xf32, #tpu.memory_space<vmem>>, %arg8: memref<128x2xbf16, #tpu.memory_space<vmem>>, %arg9: memref<1x2xf32, #tpu.memory_space<vmem>>, %arg10: memref<8x2xf32, #tpu.memory_space<vmem>>) attributes {dimension_semantics = [#tpu.dimension_semantics<parallel>], iteration_bounds = array<i64: 1>, scalar_prefetch = 0 : i64, scratch_operands = 0 : i64, tpu.core_type = #tpu.core_type<tc>, window_params = [{transform_indices = @transform_0, window_bounds = array<i64: 8, 24>}, {pipeline_mode = #tpu.pipeline_mode<synchronous>, transform_indices = @transform_1, window_bounds = array<i64: 24, 128>}, {pipeline_mode = #tpu.pipeline_mode<synchronous>, transform_indices = @transform_2, window_bounds = array<i64: 1, 128>}, {pipeline_mode = #tpu.pipeline_mode<synchronous>, transform_indices = @transform_3, window_bounds = array<i64: 128, 128>}, {pipeline_mode = #tpu.pipeline_mode<synchronous>, transform_indices = @transform_4, window_bounds = array<i64: 1, 128>}, {pipeline_mode = #tpu.pipeline_mode<synchronous>, transform_indices = @transform_5, window_bounds = array<i64: 128, 128>}, {pipeline_mode = #tpu.pipeline_mode<synchronous>, transform_indices = @transform_6, window_bounds = array<i64: 1, 128>}, {pipeline_mode = #tpu.pipeline_mode<synchronous>, transform_indices = @transform_7, window_bounds = array<i64: 128, 2>}, {pipeline_mode = #tpu.pipeline_mode<synchronous>, transform_indices = @transform_8, window_bounds = array<i64: 1, 2>}, {transform_indices = @transform_9, window_bounds = array<i64: 8, 2>}]} {
    %c0 = arith.constant 0 : index
    %c0_0 = arith.constant 0 : index
    %0 = vector.load %arg1[%c0, %c0_0] : memref<8x24xf32, #tpu.memory_space<vmem>>, vector<8x24xf32>
    %1 = arith.truncf %0 : vector<8x24xf32> to vector<8x24xbf16>
    %c0_1 = arith.constant 0 : index
    %c0_2 = arith.constant 0 : index
    %2 = vector.load %arg2[%c0_1, %c0_2] : memref<24x128xbf16, #tpu.memory_space<vmem>>, vector<24x128xbf16>
    %cst = arith.constant dense<0.000000e+00> : vector<8x128xf32>
    %3 = tpu.matmul %1, %2, %cst {dimension_numbers = #tpu.dot_dimension_numbers<[1], [0], [0], [1], [0, 0, 1, 1], [], []>} : vector<8x24xbf16>, vector<24x128xbf16>, vector<8x128xf32> -> vector<8x128xf32>
    %c0_3 = arith.constant 0 : index
    %c0_4 = arith.constant 0 : index
    %4 = vector.load %arg3[%c0_3, %c0_4] : memref<1x128xf32, #tpu.memory_space<vmem>>, vector<1x128xf32>
    %5 = vector.broadcast %4 : vector<1x128xf32> to vector<8x128xf32>
    %6 = arith.addf %3, %5 : vector<8x128xf32>
    %cst_5 = arith.constant 0.000000e+00 : f32
    %7 = vector.broadcast %cst_5 : f32 to vector<8x128xf32>
    %8 = arith.maximumf %6, %7 : vector<8x128xf32>
    %9 = arith.truncf %8 : vector<8x128xf32> to vector<8x128xbf16>
    %c0_6 = arith.constant 0 : index
    %c0_7 = arith.constant 0 : index
    %10 = vector.load %arg4[%c0_6, %c0_7] : memref<128x128xbf16, #tpu.memory_space<vmem>>, vector<128x128xbf16>
    %cst_8 = arith.constant dense<0.000000e+00> : vector<8x128xf32>
    %11 = tpu.matmul %9, %10, %cst_8 {dimension_numbers = #tpu.dot_dimension_numbers<[1], [0], [0], [1], [0, 0, 1, 1], [], []>} : vector<8x128xbf16>, vector<128x128xbf16>, vector<8x128xf32> -> vector<8x128xf32>
    %c0_9 = arith.constant 0 : index
    %c0_10 = arith.constant 0 : index
    %12 = vector.load %arg5[%c0_9, %c0_10] : memref<1x128xf32, #tpu.memory_space<vmem>>, vector<1x128xf32>
    %13 = vector.broadcast %12 : vector<1x128xf32> to vector<8x128xf32>
    %14 = arith.addf %11, %13 : vector<8x128xf32>
    %cst_11 = arith.constant 0.000000e+00 : f32
    %15 = vector.broadcast %cst_11 : f32 to vector<8x128xf32>
    %16 = arith.maximumf %14, %15 : vector<8x128xf32>
    %17 = arith.truncf %16 : vector<8x128xf32> to vector<8x128xbf16>
    %c0_12 = arith.constant 0 : index
    %c0_13 = arith.constant 0 : index
    %18 = vector.load %arg6[%c0_12, %c0_13] : memref<128x128xbf16, #tpu.memory_space<vmem>>, vector<128x128xbf16>
    %cst_14 = arith.constant dense<0.000000e+00> : vector<8x128xf32>
    %19 = tpu.matmul %17, %18, %cst_14 {dimension_numbers = #tpu.dot_dimension_numbers<[1], [0], [0], [1], [0, 0, 1, 1], [], []>} : vector<8x128xbf16>, vector<128x128xbf16>, vector<8x128xf32> -> vector<8x128xf32>
    %c0_15 = arith.constant 0 : index
    %c0_16 = arith.constant 0 : index
    %20 = vector.load %arg7[%c0_15, %c0_16] : memref<1x128xf32, #tpu.memory_space<vmem>>, vector<1x128xf32>
    %21 = vector.broadcast %20 : vector<1x128xf32> to vector<8x128xf32>
    %22 = arith.addf %19, %21 : vector<8x128xf32>
    %cst_17 = arith.constant 0.000000e+00 : f32
    %23 = vector.broadcast %cst_17 : f32 to vector<8x128xf32>
    %24 = arith.maximumf %22, %23 : vector<8x128xf32>
    %25 = arith.truncf %24 : vector<8x128xf32> to vector<8x128xbf16>
    %c0_18 = arith.constant 0 : index
    %c0_19 = arith.constant 0 : index
    %26 = vector.load %arg8[%c0_18, %c0_19] : memref<128x2xbf16, #tpu.memory_space<vmem>>, vector<128x2xbf16>
    %cst_20 = arith.constant dense<0.000000e+00> : vector<8x2xf32>
    %27 = tpu.matmul %25, %26, %cst_20 {dimension_numbers = #tpu.dot_dimension_numbers<[1], [0], [0], [1], [0, 0, 1, 1], [], []>} : vector<8x128xbf16>, vector<128x2xbf16>, vector<8x2xf32> -> vector<8x2xf32>
    %c0_21 = arith.constant 0 : index
    %c0_22 = arith.constant 0 : index
    %28 = vector.load %arg9[%c0_21, %c0_22] : memref<1x2xf32, #tpu.memory_space<vmem>>, vector<1x2xf32>
    %29 = vector.broadcast %28 : vector<1x2xf32> to vector<8x2xf32>
    %30 = arith.addf %27, %29 : vector<8x2xf32>
    %c0_23 = arith.constant 0 : index
    %c0_24 = arith.constant 0 : index
    %31 = vector.load %arg10[%c0_23, %c0_24] : memref<8x2xf32, #tpu.memory_space<vmem>>, vector<8x2xf32>
    tpu.vector_store %arg10[%c0_23, %c0_24], %30 {strides = array<i32>} : memref<8x2xf32, #tpu.memory_space<vmem>>, vector<8x2xf32>,
    return
  }
  func.func @transform_0(%arg0: i32) -> (i32, i32) {
    %c0_i32 = arith.constant 0 : i32
    %c0_i32_0 = arith.constant 0 : i32
    return %arg0, %c0_i32 : i32, i32
  }
  func.func @transform_1(%arg0: i32) -> (i32, i32) {
    %c0_i32 = arith.constant 0 : i32
    %c0_i32_0 = arith.constant 0 : i32
    %c0_i32_1 = arith.constant 0 : i32
    return %c0_i32, %c0_i32_0 : i32, i32
  }
  func.func @transform_2(%arg0: i32) -> (i32, i32) {
    %c0_i32 = arith.constant 0 : i32
    %c0_i32_0 = arith.constant 0 : i32
    %c0_i32_1 = arith.constant 0 : i32
    return %c0_i32, %c0_i32_0 : i32, i32
  }
  func.func @transform_3(%arg0: i32) -> (i32, i32) {
    %c0_i32 = arith.constant 0 : i32
    %c0_i32_0 = arith.constant 0 : i32
    %c0_i32_1 = arith.constant 0 : i32
    return %c0_i32, %c0_i32_0 : i32, i32
  }
  func.func @transform_4(%arg0: i32) -> (i32, i32) {
    %c0_i32 = arith.constant 0 : i32
    %c0_i32_0 = arith.constant 0 : i32
    %c0_i32_1 = arith.constant 0 : i32
    return %c0_i32, %c0_i32_0 : i32, i32
  }
  func.func @transform_5(%arg0: i32) -> (i32, i32) {
    %c0_i32 = arith.constant 0 : i32
    %c0_i32_0 = arith.constant 0 : i32
    %c0_i32_1 = arith.constant 0 : i32
    return %c0_i32, %c0_i32_0 : i32, i32
  }
  func.func @transform_6(%arg0: i32) -> (i32, i32) {
    %c0_i32 = arith.constant 0 : i32
    %c0_i32_0 = arith.constant 0 : i32
    %c0_i32_1 = arith.constant 0 : i32
    return %c0_i32, %c0_i32_0 : i32, i32
  }
  func.func @transform_7(%arg0: i32) -> (i32, i32) {
    %c0_i32 = arith.constant 0 : i32
    %c0_i32_0 = arith.constant 0 : i32
    %c0_i32_1 = arith.constant 0 : i32
    return %c0_i32, %c0_i32_0 : i32, i32
  }
  func.func @transform_8(%arg0: i32) -> (i32, i32) {
    %c0_i32 = arith.constant 0 : i32
    %c0_i32_0 = arith.constant 0 : i32
    %c0_i32_1 = arith.constant 0 : i32
    return %c0_i32, %c0_i32_0 : i32, i32
  }
  func.func @transform_9(%arg0: i32) -> (i32, i32) {
    %c0_i32 = arith.constant 0 : i32
    %c0_i32_0 = arith.constant 0 : i32
    return %arg0, %c0_i32 : i32, i32
  }
}

</mosaic_0001>

<llo_original>
// kernel: tpu_custom_call.1
$region0: #{tpu_custom_call.1}
  #allocation0 [shape = 'u32[]', space=smem, size = 0x4, offset = 0x4, fixed_abs, tag = 'smem constant byte address 0x4 - core index']
  #allocation1 [shape = 'u32[144,128]{1,0:T(1,128)}', space=vmem, size = 0x12000, scoped, tag = 'internal scratch']
  %s0 = inlined_call_operand.hbm [shape: f32[8,24], index: 0, kind: input, shape index: {}]
  %s1 = inlined_call_operand.vmem [shape: bf16[24,128], index: 1, kind: input, shape index: {}]
  %s2 = inlined_call_operand.hbm [shape: f32[1,128], index: 2, kind: input, shape index: {}]
  %s3 = inlined_call_operand.vmem [shape: bf16[128,128], index: 3, kind: input, shape index: {}]
  %s4 = inlined_call_operand.vmem [shape: f32[1,128], index: 4, kind: input, shape index: {}]
  %s5 = inlined_call_operand.hbm [shape: bf16[128,128], index: 5, kind: input, shape index: {}]
  %s6 = inlined_call_operand.vmem [shape: f32[1,128], index: 6, kind: input, shape index: {}]
  %s7 = inlined_call_operand.vmem [shape: bf16[128,2], index: 7, kind: input, shape index: {}]
  %s8 = inlined_call_operand.vmem [shape: f32[1,2], index: 8, kind: input, shape index: {}]
  %s9 = inlined_call_operand.vmem [shape: f32[8,2], index: 9, kind: output, shape index: {}]
  %s10 = sld [smem:[#allocation0]]
  $region58: #{tpu_custom_call.1} parent=0
    _
  %s12 = ssub.s32 1, %s10
  %s13 = scalar_select 0, %s12, %s10
  $region1: #{tpu_custom_call.1} parent=0
    #allocation2 [shape = 'u8[4096]{0}', space=vmem, size = 0x1000, scoped, tag = 'input window, operand 0, single buffered']
    #allocation3 [shape = 's32[1]{0}', space=sflag, size = 0x4, scoped, tag = 'scoped memory for tpu_custom_call.1']
    #allocation4 [shape = 'u8[512]{0}', space=vmem, size = 0x400, scoped, tag = 'input window, operand 2, single buffered']
    #allocation5 [shape = 's32[1]{0}', space=sflag, size = 0x4, scoped, tag = 'scoped memory for tpu_custom_call.1']
    #allocation6 [shape = 'u8[32768]{0}', space=vmem, size = 0x8000, scoped, tag = 'input window, operand 5, single buffered']
    %14 = vsyncpa [#allocation3], 0
    %15 = vsyncpa [#allocation5], 0
    // Predicated region
    $region2: #{tpu_custom_call.1} parent=1 // pred_check
      _
    $region3: #{tpu_custom_call.1} parent=1 // pred_check_branch
      %17 = sbr.rel (0) target = $region5
    $region4: #{tpu_custom_call.1} parent=1 // pred_region
      %s19 = ssub.s32 128, 128
      %20 = vsyncadd [#allocation3], %s19
      %s22 = sshll.u32 [#allocation2], 4
      %s23 = int_to_ptr.vmem [resolvable:$true] %s22
      %25 = dma.hbm_to_vmem [thread:$0]  %s0, 128, %s23, [#allocation3]
    $region5: #{tpu_custom_call.1} parent=1 // pred_fallthru
      _
    // Predicated region
    $region6: #{tpu_custom_call.1} parent=1 // pred_check
      _
    $region7: #{tpu_custom_call.1} parent=1 // pred_check_branch
      %27 = sbr.rel (0) target = $region9
    $region8: #{tpu_custom_call.1} parent=1 // pred_region
      _
    $region9: #{tpu_custom_call.1} parent=1 // pred_fallthru
      _
    // Predicated region
    $region10: #{tpu_custom_call.1} parent=1 // pred_check
      _
    $region11: #{tpu_custom_call.1} parent=1 // pred_check_branch
      %29 = sbr.rel (0) target = $region13
    $region12: #{tpu_custom_call.1} parent=1 // pred_region
      %s31 = ssub.s32 16, 16
      %32 = vsyncadd [#allocation5], %s31
      %s34 = sshll.u32 [#allocation4], 4
      %s35 = int_to_ptr.vmem [resolvable:$true] %s34
      %37 = dma.hbm_to_vmem [thread:$0]  %s2, 16, %s35, [#allocation5]
    $region13: #{tpu_custom_call.1} parent=1 // pred_fallthru
      _
    // Predicated region
    $region14: #{tpu_custom_call.1} parent=1 // pred_check
      _
    $region15: #{tpu_custom_call.1} parent=1 // pred_check_branch
      %39 = sbr.rel (0) target = $region17
    $region16: #{tpu_custom_call.1} parent=1 // pred_region
      _
    $region17: #{tpu_custom_call.1} parent=1 // pred_fallthru
      _
    // Predicated region
    $region18: #{tpu_custom_call.1} parent=1 // pred_check
      _
    $region19: #{tpu_custom_call.1} parent=1 // pred_check_branch
      %41 = sbr.rel (0) target = $region21
    $region20: #{tpu_custom_call.1} parent=1 // pred_region
      _
    $region21: #{tpu_custom_call.1} parent=1 // pred_fallthru
      _
    // Predicated region
    $region22: #{tpu_custom_call.1} parent=1 // pred_check
      _
    $region23: #{tpu_custom_call.1} parent=1 // pred_check_branch
      %43 = sbr.rel (0) target = $region25
    $region24: #{tpu_custom_call.1} parent=1 // pred_region
      %s45 = ssub.s32 1024, 1024
      %46 = vsyncadd [#allocation5], %s45
      %s47 = sshll.u32 [#allocation6], 4
      %s48 = int_to_ptr.vmem [resolvable:$true] %s47
      %53 = dma.hbm_to_vmem [thread:$0]  %s5, 1024, %s48, [#allocation5], 64, 64, 4
    $region25: #{tpu_custom_call.1} parent=1 // pred_fallthru
      _
    // Predicated region
    $region26: #{tpu_custom_call.1} parent=1 // pred_check
      _
    $region27: #{tpu_custom_call.1} parent=1 // pred_check_branch
      %55 = sbr.rel (0) target = $region29
    $region28: #{tpu_custom_call.1} parent=1 // pred_region
      _
    $region29: #{tpu_custom_call.1} parent=1 // pred_fallthru
      _
    // Predicated region
    $region30: #{tpu_custom_call.1} parent=1 // pred_check
      _
    $region31: #{tpu_custom_call.1} parent=1 // pred_check_branch
      %57 = sbr.rel (0) target = $region33
    $region32: #{tpu_custom_call.1} parent=1 // pred_region
      _
    $region33: #{tpu_custom_call.1} parent=1 // pred_fallthru
      _
    // Predicated region
    $region34: #{tpu_custom_call.1} parent=1 // pred_check
      _
    $region35: #{tpu_custom_call.1} parent=1 // pred_check_branch
      %59 = sbr.rel (0) target = $region37
    $region36: #{tpu_custom_call.1} parent=1 // pred_region
      _
    $region37: #{tpu_custom_call.1} parent=1 // pred_fallthru
      _
    // Predicated region
    $region38: #{tpu_custom_call.1} parent=1 // pred_check
      _
    $region39: #{tpu_custom_call.1} parent=1 // pred_check_branch
      %61 = sbr.rel (0) target = $region41
    $region40: #{tpu_custom_call.1} parent=1 // pred_region
      %62 = dma.done [#allocation3], 128
    $region41: #{tpu_custom_call.1} parent=1 // pred_fallthru
      _
    // Predicated region
    $region42: #{tpu_custom_call.1} parent=1 // pred_check
      _
    $region43: #{tpu_custom_call.1} parent=1 // pred_check_branch
      %64 = sbr.rel (0) target = $region45
    $region44: #{tpu_custom_call.1} parent=1 // pred_region
      %65 = dma.done [#allocation5], 16
    $region45: #{tpu_custom_call.1} parent=1 // pred_fallthru
      _
    // Predicated region
    $region46: #{tpu_custom_call.1} parent=1 // pred_check
      _
    $region47: #{tpu_custom_call.1} parent=1 // pred_check_branch
      %67 = sbr.rel (0) target = $region49
    $region48: #{tpu_custom_call.1} parent=1 // pred_region
      %68 = dma.done [#allocation5], 1024
    $region49: #{tpu_custom_call.1} parent=1 // pred_fallthru
      _
    %v70 = vld [vmem:[#allocation2] sm:$0xff]
    %v71 = vpack.c.bf16 %v70, %v70
    %v72 = vld [vmem:[%s1] sm:$0xf]
    %v73 = vld [vmem:[%s1 + $0x4] sm:$0xf]
    %v74 = vld [vmem:[%s1 + $0x8] sm:$0xf]
    %v75 = vld [vmem:[#allocation4] sm:$0x1]
    %v77 = vlaneseq
    %v78 = vshrl.u32 %v77, 7
    %v79 = vsub.s32 0, %v78
    %v80 = vrot.slane %v75, %v79
    %v85 = vunpack.c.l.b16 %v72
    %v86 = vunpack.c.l.b16 %v73
    %v87 = vunpack.c.l.b16 %v74
    %v88 = vpack.c.b16 %v86, %v85
    %v89 = vpack.c.b16 %v87, %v87
    %vm91 = vcmask 195584
    %v93 = vsel %vm91, %v71, 0
    %vm95 = vcmask 1043456
    %v97 = vsel %vm95, %v89, 0
    %99 = vmatprep.subr.bf16.mxu0 0
    %100 = vmatpush1.bf16.msra.mxu0 %v88
    %101 = vmatprep.subr.bf16.mxu0 0
    %102 = vmatpush1.bf16.msra.mxu0 %v97
    %103 = vmatprep.subr.bf16.mxu0 0
    %104 = vmatpush1.bf16.msra.mxu0 0
    %105 = vmatprep.subr.bf16.mxu0 0
    %106 = vmatpush1.bf16.msra.mxu0 0
    %107 = vmatprep.subr.bf16.mxu0 0
    %108 = vmatpush1.bf16.msra.mxu0 0
    %109 = vmatprep.subr.bf16.mxu0 0
    %110 = vmatpush1.bf16.msra.mxu0 0
    %111 = vmatprep.subr.bf16.mxu0 0
    %112 = vmatpush1.bf16.msra.mxu0 0
    %113 = vmatprep.subr.bf16.mxu0 0
    %114 = vmatpush1.bf16.msra.mxu0 0
    %115 = vmatprep.subr.bf16.mxu0 0
    %116 = vmatpush1.bf16.msra.mxu0 0
    %117 = vmatprep.subr.bf16.mxu0 0
    %118 = vmatpush1.bf16.msra.mxu0 0
    %119 = vmatprep.subr.bf16.mxu0 0
    %120 = vmatpush1.bf16.msra.mxu0 0
    %121 = vmatprep.subr.bf16.mxu0 0
    %122 = vmatpush1.bf16.msra.mxu0 0
    %123 = vmatprep.subr.bf16.mxu0 0
    %124 = vmatpush1.bf16.msra.mxu0 0
    %125 = vmatprep.subr.bf16.mxu0 0
    %126 = vmatpush1.bf16.msra.mxu0 0
    %127 = vmatprep.subr.bf16.mxu0 0
    %128 = vmatpush1.bf16.msra.mxu0 0
    %129 = vmatprep.subr.bf16.mxu0 0
    %130 = vmatpush1.bf16.msra.mxu0 0
    %131 = vmatprep.mubr.bf16.mxu0 0
    %132 = vmatmul.mubr.bf16.gmra.mrb[0].mxu0 %v93
    %v133 = vpop.f32.mrb[0].mxu0
    %v134 = vadd.f32 %v80, %v133
    %v135 = vpop.f32.mrb[0].mxu0
    %v136 = vpop.f32.mrb[0].mxu0
    %v137 = vpop.f32.mrb[0].mxu0
    %138 = vdwg.mxu0
    %v139 = vmax.f32 %v134, 0.0
    %v140 = vpack.c.bf16 %v139, %v139
    %v141 = vld [vmem:[%s3] sm:$0xf]
    %v142 = vld [vmem:[%s3 + $0x4] sm:$0xf]
    %v143 = vld [vmem:[%s3 + $0x8] sm:$0xf]
    %v144 = vld [vmem:[%s3 + $0xc] sm:$0xf]
    %v145 = vld [vmem:[%s3 + $0x10] sm:$0xf]
    %v146 = vld [vmem:[%s3 + $0x14] sm:$0xf]
    %v147 = vld [vmem:[%s3 + $0x18] sm:$0xf]
    %v148 = vld [vmem:[%s3 + $0x1c] sm:$0xf]
    %v149 = vld [vmem:[%s3 + $0x20] sm:$0xf]
    %v150 = vld [vmem:[%s3 + $0x24] sm:$0xf]
    %v151 = vld [vmem:[%s3 + $0x28] sm:$0xf]
    %v152 = vld [vmem:[%s3 + $0x2c] sm:$0xf]
    %v153 = vld [vmem:[%s3 + $0x30] sm:$0xf]
    %v154 = vld [vmem:[%s3 + $0x34] sm:$0xf]
    %v155 = vld [vmem:[%s3 + $0x38] sm:$0xf]
    %v156 = vld [vmem:[%s3 + $0x3c] sm:$0xf]
    %v157 = vld [vmem:[%s4] sm:$0x1]
    %v159 = vlaneseq
    %v160 = vshrl.u32 %v159, 7
    %v161 = vsub.s32 0, %v160
    %v162 = vrot.slane %v157, %v161
    %v180 = vunpack.c.l.b16 %v141
    %v181 = vunpack.c.l.b16 %v142
    %v182 = vunpack.c.l.b16 %v143
    %v183 = vunpack.c.l.b16 %v144
    %v184 = vunpack.c.l.b16 %v145
    %v185 = vunpack.c.l.b16 %v146
    %v186 = vunpack.c.l.b16 %v147
    %v187 = vunpack.c.l.b16 %v148
    %v188 = vunpack.c.l.b16 %v149
    %v189 = vunpack.c.l.b16 %v150
    %v190 = vunpack.c.l.b16 %v151
    %v191 = vunpack.c.l.b16 %v152
    %v192 = vunpack.c.l.b16 %v153
    %v193 = vunpack.c.l.b16 %v154
    %v194 = vunpack.c.l.b16 %v155
    %v195 = vunpack.c.l.b16 %v156
    %v196 = vpack.c.b16 %v181, %v180
    %v197 = vpack.c.b16 %v183, %v182
    %v198 = vpack.c.b16 %v185, %v184
    %v199 = vpack.c.b16 %v187, %v186
    %v200 = vpack.c.b16 %v189, %v188
    %v201 = vpack.c.b16 %v191, %v190
    %v202 = vpack.c.b16 %v193, %v192
    %v203 = vpack.c.b16 %v195, %v194
    %212 = vmatprep.subr.bf16.mxu0 0
    %213 = vmatpush1.bf16.msra.mxu0 %v196
    %214 = vmatprep.subr.bf16.mxu0 0
    %215 = vmatpush1.bf16.msra.mxu0 %v197
    %216 = vmatprep.subr.bf16.mxu0 0
    %217 = vmatpush1.bf16.msra.mxu0 %v198
    %218 = vmatprep.subr.bf16.mxu0 0
    %219 = vmatpush1.bf16.msra.mxu0 %v199
    %220 = vmatprep.subr.bf16.mxu0 0
    %221 = vmatpush1.bf16.msra.mxu0 %v200
    %222 = vmatprep.subr.bf16.mxu0 0
    %223 = vmatpush1.bf16.msra.mxu0 %v201
    %224 = vmatprep.subr.bf16.mxu0 0
    %225 = vmatpush1.bf16.msra.mxu0 %v202
    %226 = vmatprep.subr.bf16.mxu0 0
    %227 = vmatpush1.bf16.msra.mxu0 %v203
    %228 = vmatprep.subr.bf16.mxu0 0
    %229 = vmatpush1.bf16.msra.mxu0 0
    %230 = vmatprep.subr.bf16.mxu0 0
    %231 = vmatpush1.bf16.msra.mxu0 0
    %232 = vmatprep.subr.bf16.mxu0 0
    %233 = vmatpush1.bf16.msra.mxu0 0
    %234 = vmatprep.subr.bf16.mxu0 0
    %235 = vmatpush1.bf16.msra.mxu0 0
    %236 = vmatprep.subr.bf16.mxu0 0
    %237 = vmatpush1.bf16.msra.mxu0 0
    %238 = vmatprep.subr.bf16.mxu0 0
    %239 = vmatpush1.bf16.msra.mxu0 0
    %240 = vmatprep.subr.bf16.mxu0 0
    %241 = vmatpush1.bf16.msra.mxu0 0
    %242 = vmatprep.subr.bf16.mxu0 0
    %243 = vmatpush1.bf16.msra.mxu0 0
    %244 = vmatprep.mubr.bf16.mxu0 0
    %245 = vmatmul.mubr.bf16.gmra.mrb[0].mxu0 %v140
    %v246 = vpop.f32.mrb[0].mxu0
    %v247 = vadd.f32 %v162, %v246
    %v248 = vpop.f32.mrb[0].mxu0
    %v249 = vpop.f32.mrb[0].mxu0
    %v250 = vpop.f32.mrb[0].mxu0
    %251 = vdwg.mxu0
    %v252 = vmax.f32 %v247, 0.0
    %v253 = vpack.c.bf16 %v252, %v252
    %v254 = vld [vmem:[#allocation6] sm:$0xf]
    %v255 = vld [vmem:[#allocation6 + $0x4] sm:$0xf]
    %v256 = vld [vmem:[#allocation6 + $0x8] sm:$0xf]
    %v257 = vld [vmem:[#allocation6 + $0xc] sm:$0xf]
    %v258 = vld [vmem:[#allocation6 + $0x10] sm:$0xf]
    %v259 = vld [vmem:[#allocation6 + $0x14] sm:$0xf]
    %v260 = vld [vmem:[#allocation6 + $0x18] sm:$0xf]
    %v261 = vld [vmem:[#allocation6 + $0x1c] sm:$0xf]
    %v262 = vld [vmem:[#allocation6 + $0x20] sm:$0xf]
    %v263 = vld [vmem:[#allocation6 + $0x24] sm:$0xf]
    %v264 = vld [vmem:[#allocation6 + $0x28] sm:$0xf]
    %v265 = vld [vmem:[#allocation6 + $0x2c] sm:$0xf]
    %v266 = vld [vmem:[#allocation6 + $0x30] sm:$0xf]
    %v267 = vld [vmem:[#allocation6 + $0x34] sm:$0xf]
    %v268 = vld [vmem:[#allocation6 + $0x38] sm:$0xf]
    %v269 = vld [vmem:[#allocation6 + $0x3c] sm:$0xf]
    %v270 = vld [vmem:[%s6] sm:$0x1]
    %v272 = vlaneseq
    %v273 = vshrl.u32 %v272, 7
    %v274 = vsub.s32 0, %v273
    %v275 = vrot.slane %v270, %v274
    %v293 = vunpack.c.l.b16 %v254
    %v294 = vunpack.c.l.b16 %v255
    %v295 = vunpack.c.l.b16 %v256
    %v296 = vunpack.c.l.b16 %v257
    %v297 = vunpack.c.l.b16 %v258
    %v298 = vunpack.c.l.b16 %v259
    %v299 = vunpack.c.l.b16 %v260
    %v300 = vunpack.c.l.b16 %v261
    %v301 = vunpack.c.l.b16 %v262
    %v302 = vunpack.c.l.b16 %v263
    %v303 = vunpack.c.l.b16 %v264
    %v304 = vunpack.c.l.b16 %v265
    %v305 = vunpack.c.l.b16 %v266
    %v306 = vunpack.c.l.b16 %v267
    %v307 = vunpack.c.l.b16 %v268
    %v308 = vunpack.c.l.b16 %v269
    %v309 = vpack.c.b16 %v294, %v293
    %v310 = vpack.c.b16 %v296, %v295
    %v311 = vpack.c.b16 %v298, %v297
    %v312 = vpack.c.b16 %v300, %v299
    %v313 = vpack.c.b16 %v302, %v301
    %v314 = vpack.c.b16 %v304, %v303
    %v315 = vpack.c.b16 %v306, %v305
    %v316 = vpack.c.b16 %v308, %v307
    %325 = vmatprep.subr.bf16.mxu0 0
    %326 = vmatpush1.bf16.msra.mxu0 %v309
    %327 = vmatprep.subr.bf16.mxu0 0
    %328 = vmatpush1.bf16.msra.mxu0 %v310
    %329 = vmatprep.subr.bf16.mxu0 0
    %330 = vmatpush1.bf16.msra.mxu0 %v311
    %331 = vmatprep.subr.bf16.mxu0 0
    %332 = vmatpush1.bf16.msra.mxu0 %v312
    %333 = vmatprep.subr.bf16.mxu0 0
    %334 = vmatpush1.bf16.msra.mxu0 %v313
    %335 = vmatprep.subr.bf16.mxu0 0
    %336 = vmatpush1.bf16.msra.mxu0 %v314
    %337 = vmatprep.subr.bf16.mxu0 0
    %338 = vmatpush1.bf16.msra.mxu0 %v315
    %339 = vmatprep.subr.bf16.mxu0 0
    %340 = vmatpush1.bf16.msra.mxu0 %v316
    %341 = vmatprep.subr.bf16.mxu0 0
    %342 = vmatpush1.bf16.msra.mxu0 0
    %343 = vmatprep.subr.bf16.mxu0 0
    %344 = vmatpush1.bf16.msra.mxu0 0
    %345 = vmatprep.subr.bf16.mxu0 0
    %346 = vmatpush1.bf16.msra.mxu0 0
    %347 = vmatprep.subr.bf16.mxu0 0
    %348 = vmatpush1.bf16.msra.mxu0 0
    %349 = vmatprep.subr.bf16.mxu0 0
    %350 = vmatpush1.bf16.msra.mxu0 0
    %351 = vmatprep.subr.bf16.mxu0 0
    %352 = vmatpush1.bf16.msra.mxu0 0
    %353 = vmatprep.subr.bf16.mxu0 0
    %354 = vmatpush1.bf16.msra.mxu0 0
    %355 = vmatprep.subr.bf16.mxu0 0
    %356 = vmatpush1.bf16.msra.mxu0 0
    %357 = vmatprep.mubr.bf16.mxu0 0
    %358 = vmatmul.mubr.bf16.gmra.mrb[0].mxu0 %v253
    %v359 = vpop.f32.mrb[0].mxu0
    %v360 = vadd.f32 %v275, %v359
    %v361 = vpop.f32.mrb[0].mxu0
    %v362 = vpop.f32.mrb[0].mxu0
    %v363 = vpop.f32.mrb[0].mxu0
    %364 = vdwg.mxu0
    %v365 = vmax.f32 %v360, 0.0
    %v366 = vpack.c.bf16 %v365, %v365
    %v367 = vld [vmem:[%s7] sm:$0xf]
    %v368 = vld [vmem:[%s7 + $0x4] sm:$0xf]
    %v369 = vld [vmem:[%s7 + $0x8] sm:$0xf]
    %v370 = vld [vmem:[%s7 + $0xc] sm:$0xf]
    %v371 = vld [vmem:[%s7 + $0x10] sm:$0xf]
    %v372 = vld [vmem:[%s7 + $0x14] sm:$0xf]
    %v373 = vld [vmem:[%s7 + $0x18] sm:$0xf]
    %v374 = vld [vmem:[%s7 + $0x1c] sm:$0xf]
    %v375 = vld [vmem:[%s7 + $0x20] sm:$0xf]
    %v376 = vld [vmem:[%s7 + $0x24] sm:$0xf]
    %v377 = vld [vmem:[%s7 + $0x28] sm:$0xf]
    %v378 = vld [vmem:[%s7 + $0x2c] sm:$0xf]
    %v379 = vld [vmem:[%s7 + $0x30] sm:$0xf]
    %v380 = vld [vmem:[%s7 + $0x34] sm:$0xf]
    %v381 = vld [vmem:[%s7 + $0x38] sm:$0xf]
    %v382 = vld [vmem:[%s7 + $0x3c] sm:$0xf]
    %v383 = vld [vmem:[%s8] sm:$0x1]
    %v385 = vlaneseq
    %v386 = vshrl.u32 %v385, 7
    %v387 = vsub.s32 0, %v386
    %v388 = vrot.slane %v383, %v387
    %v406 = vunpack.c.l.b16 %v367
    %v407 = vunpack.c.l.b16 %v368
    %v408 = vunpack.c.l.b16 %v369
    %v409 = vunpack.c.l.b16 %v370
    %v410 = vunpack.c.l.b16 %v371
    %v411 = vunpack.c.l.b16 %v372
    %v412 = vunpack.c.l.b16 %v373
    %v413 = vunpack.c.l.b16 %v374
    %v414 = vunpack.c.l.b16 %v375
    %v415 = vunpack.c.l.b16 %v376
    %v416 = vunpack.c.l.b16 %v377
    %v417 = vunpack.c.l.b16 %v378
    %v418 = vunpack.c.l.b16 %v379
    %v419 = vunpack.c.l.b16 %v380
    %v420 = vunpack.c.l.b16 %v381
    %v421 = vunpack.c.l.b16 %v382
    %v422 = vpack.c.b16 %v407, %v406
    %v423 = vpack.c.b16 %v409, %v408
    %v424 = vpack.c.b16 %v411, %v410
    %v425 = vpack.c.b16 %v413, %v412
    %v426 = vpack.c.b16 %v415, %v414
    %v427 = vpack.c.b16 %v417, %v416
    %v428 = vpack.c.b16 %v419, %v418
    %v429 = vpack.c.b16 %v421, %v420
    %438 = vmatprep.subr.bf16.mxu0 0
    %439 = vmatpush1.bf16.msra.mxu0 %v422
    %440 = vmatprep.subr.bf16.mxu0 0
    %441 = vmatpush1.bf16.msra.mxu0 %v423
    %442 = vmatprep.subr.bf16.mxu0 0
    %443 = vmatpush1.bf16.msra.mxu0 %v424
    %444 = vmatprep.subr.bf16.mxu0 0
    %445 = vmatpush1.bf16.msra.mxu0 %v425
    %446 = vmatprep.subr.bf16.mxu0 0
    %447 = vmatpush1.bf16.msra.mxu0 %v426
    %448 = vmatprep.subr.bf16.mxu0 0
    %449 = vmatpush1.bf16.msra.mxu0 %v427
    %450 = vmatprep.subr.bf16.mxu0 0
    %451 = vmatpush1.bf16.msra.mxu0 %v428
    %452 = vmatprep.subr.bf16.mxu0 0
    %453 = vmatpush1.bf16.msra.mxu0 %v429
    %454 = vmatprep.subr.bf16.mxu0 0
    %455 = vmatpush1.bf16.msra.mxu0 0
    %456 = vmatprep.subr.bf16.mxu0 0
    %457 = vmatpush1.bf16.msra.mxu0 0
    %458 = vmatprep.subr.bf16.mxu0 0
    %459 = vmatpush1.bf16.msra.mxu0 0
    %460 = vmatprep.subr.bf16.mxu0 0
    %461 = vmatpush1.bf16.msra.mxu0 0
    %462 = vmatprep.subr.bf16.mxu0 0
    %463 = vmatpush1.bf16.msra.mxu0 0
    %464 = vmatprep.subr.bf16.mxu0 0
    %465 = vmatpush1.bf16.msra.mxu0 0
    %466 = vmatprep.subr.bf16.mxu0 0
    %467 = vmatpush1.bf16.msra.mxu0 0
    %468 = vmatprep.subr.bf16.mxu0 0
    %469 = vmatpush1.bf16.msra.mxu0 0
    %470 = vmatprep.mubr.bf16.mxu0 0
    %471 = vmatmul.mubr.bf16.gmra.mrb[0].mxu0 %v366
    %v472 = vpop.f32.mrb[0].mxu0
    %v473 = vadd.f32 %v388, %v472
    %v474 = vpop.f32.mrb[0].mxu0
    %v475 = vpop.f32.mrb[0].mxu0
    %v476 = vpop.f32.mrb[0].mxu0
    %477 = vdwg.mxu0
    %vm478 = vcmask 15360
    %479 = vst.msk [vmem:[%s9] sm:$0xff] %vm478, %v473
    // Predicated region
    $region50: #{tpu_custom_call.1} parent=1 // pred_check
      _
    $region51: #{tpu_custom_call.1} parent=1 // pred_check_branch
      %481 = sbr.rel (0) target = $region53
    $region52: #{tpu_custom_call.1} parent=1 // pred_region
      _
    $region53: #{tpu_custom_call.1} parent=1 // pred_fallthru
      _
    // Predicated region
    $region54: #{tpu_custom_call.1} parent=1 // pred_check
      _
    $region55: #{tpu_custom_call.1} parent=1 // pred_check_branch
      %483 = sbr.rel (0) target = $region57
    $region56: #{tpu_custom_call.1} parent=1 // pred_region
      _
    $region57: #{tpu_custom_call.1} parent=1 // pred_fallthru
      _
    %484 = vsyncpa [#allocation3], 1
    %485 = vsyncpa [#allocation5], 1

</llo_original>
